<compile_context>
chip_gen: v6e
topology: v6e:2x2x1
jax: 0.10.0
libtpu: 0.0.40
codegen_flags: <defaults>
</compile_context>

<pallas_src>
import jax
import jax.numpy as jnp
from jax.experimental import pallas as pl
from jax.experimental.pallas import tpu as pltpu


def _num_tensorcores():
    """Best-effort detection of TensorCores per chip (2 on v7x, else 1)."""
    try:
        kind = jax.devices()[0].device_kind.lower()
        return 2 if ("v7" in kind or "7x" in kind) else 1
    except Exception:
        return 1


def _pick_batch_tile(B, C, HW, K, O, itemsize, *, vmem_budget=16 << 20, max_unroll=8):
    """Largest divisor of B (capped at `max_unroll` to bound the static unroll)
    whose per-grid-step VMEM residency fits `vmem_budget`.  On multi-TensorCore
    chips (v7x) prefer an even number of grid steps so both cores get equal work
    and each core still overlaps DMA with compute; on single-core chips a single
    big step minimizes per-step overhead."""
    cpad = -(-C // 8) * 8            # sublane padding of the x block
    opad = -(-O // 8) * 8            # sublane padding of the out block
    kpad = -(-K // 8) * 8            # sublane padding of the RHS scratch

    def step_bytes(bt):
        x_blk = 2 * bt * cpad * HW * itemsize   # double-buffered input block
        o_blk = 2 * bt * opad * HW * itemsize   # double-buffered output block
        tmp = 2 * kpad * HW * 4                 # shifted taps + RHS build (f32 bound)
        return x_blk + o_blk + tmp

    divisors = [d for d in range(1, B + 1) if B % d == 0 and d <= max_unroll]
    fitting = [d for d in divisors if step_bytes(d) <= vmem_budget] or [1]
    bt = max(fitting)
    if _num_tensorcores() >= 2:
        even = [d for d in fitting if (B // d) % 2 == 0]
        if even:
            bt = max(even)
    return bt


def _make_sepconv_kernel(Bt, C, HW, W, KH, KW, mxu_dtype):
    """Fused (depthwise*pointwise) matmul kernel.

    x_ref : (Bt, C, HW)        activations, spatial flattened onto lanes
    wf_ref: (O, KH*KW*C)       fused weight, bf16
    o_ref : (Bt, O, HW)        output, lane-dense
    """
    def kernel(x_ref, wf_ref, o_ref):
        wf = wf_ref[...]                              # (O, K)  loaded once

        for b in range(Bt):                           # static, small unroll
            xb = x_ref[b]                             # (C, HW)
            taps = []
            for i in range(KH):
                for j in range(KW):
                    s = i * W + j                     # flat spatial shift of tap (i, j)
                    if s == 0:
                        taps.append(xb)
                    else:
                        # Left-rotation of the lane axis by s (XLU; equivalently
                        # pltpu.roll).  The wrapped tail only lands in output
                        # columns with w >= W_out / h >= H_out, which the wrapper
                        # slices off.
                        taps.append(jnp.concatenate([xb[:, s:], xb[:, :s]], axis=1))

            # RHS rows ordered as k = (i*KW + j)*C + c — matches wf's column order.
            rhs = jnp.concatenate(taps, axis=0).astype(mxu_dtype)   # (K, HW)

            # One MXU matmul: (O, K) @ (K, HW) -> (O, HW), f32 accumulation.
            out = jnp.dot(wf, rhs, preferred_element_type=jnp.float32)
            o_ref[b] = out.astype(o_ref.dtype)

    return kernel


def separable_conv2d(x, dw_weight, pw_weight, *, mxu_dtype=jnp.bfloat16):
    """x: (B, C, H, W); dw_weight: (C, KH, KW); pw_weight: (O, C).

    Returns (B, O, H-KH+1, W-KW+1), matching
    nn.Conv2d(C, C, (KH,KW), groups=C, bias=False) -> nn.Conv2d(C, O, 1, bias=False).
    """
    B, C, H, W = x.shape
    Cw, KH, KW = dw_weight.shape
    O, Cp = pw_weight.shape
    if not (C == Cw == Cp):
        raise ValueError("channel mismatch between x / depthwise / pointwise weights")
    if KH > H or KW > W:
        raise ValueError("kernel larger than input (VALID conv would be empty)")

    H_out, W_out = H - KH + 1, W - KW + 1
    HW = H * W
    K = KH * KW * C

    # ---- wrapper-side weight fusion & layout plumbing (outside the kernel) ----
    # wf[o, (i,j,c)] = pw[o,c] * dw[c,i,j], combined in f32, cast to bf16 once.
    wf = (pw_weight.astype(jnp.float32)[:, None, None, :] *
          jnp.transpose(dw_weight.astype(jnp.float32), (1, 2, 0))[None])   # (O,KH,KW,C)
    wf = wf.reshape(O, K).astype(mxu_dtype)

    # Spatial flattened onto the lane axis; channels on sublanes (dense lanes).
    x_flat = x.reshape(B, C, HW)

    Bt = _pick_batch_tile(B, C, HW, K, O, x.dtype.itemsize)
    grid = (B // Bt,)

    kernel = _make_sepconv_kernel(Bt, C, HW, W, KH, KW, mxu_dtype)

    flops = 2 * B * HW * K * O
    bytes_accessed = (x_flat.size * x.dtype.itemsize
                      + wf.size * wf.dtype.itemsize
                      + B * O * HW * x.dtype.itemsize)

    out_flat = pl.pallas_call(
        kernel,
        out_shape=jax.ShapeDtypeStruct((B, O, HW), x.dtype),
        grid_spec=pltpu.PrefetchScalarGridSpec(
            num_scalar_prefetch=0,
            grid=grid,
            in_specs=[
                pl.BlockSpec((Bt, C, HW), lambda b: (b, 0, 0)),   # activations
                pl.BlockSpec((O, K), lambda b: (0, 0)),           # fused weight (grid-invariant)
            ],
            out_specs=pl.BlockSpec((Bt, O, HW), lambda b: (b, 0, 0)),
        ),
        compiler_params=pltpu.CompilerParams(
            dimension_semantics=("parallel",),       # batch steps shard across TCs on v7x
            vmem_limit_bytes=32 * 1024 * 1024,       # <= physical on v5e/v6e/v7x
        ),
        cost_estimate=pl.CostEstimate(flops=flops, transcendentals=0,
                                      bytes_accessed=bytes_accessed),
    )(x_flat, wf)

    # Strip the invalid columns (w >= W_out, h >= H_out) and restore NCHW.
    out = out_flat.reshape(B, O, H, W)[:, :, :H_out, :W_out]
    return out


def _reference(x, dw_weight, pw_weight):
    """Pure-JAX reference matching PyTorch Conv2d semantics (f32)."""
    C = x.shape[1]
    dw4 = dw_weight[:, None, :, :]                 # (C, 1, KH, KW)
    pw4 = pw_weight[:, :, None, None]              # (O, C, 1, 1)
    y = jax.lax.conv_general_dilated(
        x, dw4, window_strides=(1, 1), padding="VALID",
        dimension_numbers=("NCHW", "OIHW", "NCHW"),
        feature_group_count=C)
    z = jax.lax.conv_general_dilated(
        y, pw4, window_strides=(1, 1), padding="VALID",
        dimension_numbers=("NCHW", "OIHW", "NCHW"))
    return z


if __name__ == "__main__":
    # Small shapes consistent with the module's forward: (B, C, H, W)
    B, C, H, W = 2, 4, 16, 16
    O = 8                      # out_channels
    KH, KW = 1, 5              # kernel_size (h, w), no padding, stride 1 (EEGNet-style)

    key = jax.random.PRNGKey(0)
    kx, kdw, kpw = jax.random.split(key, 3)
    x = jax.random.normal(kx, (B, C, H, W), dtype=jnp.float32)
    dw_weight = jax.random.normal(kdw, (C, KH, KW), dtype=jnp.float32) * 0.1
    pw_weight = jax.random.normal(kpw, (O, C), dtype=jnp.float32) * 0.1

    out = jax.block_until_ready(separable_conv2d(x, dw_weight, pw_weight))
    ref = jax.block_until_ready(_reference(x, dw_weight, pw_weight))

    assert out.shape == (B, O, H - KH + 1, W - KW + 1), out.shape
    # bf16 MXU operands (f32 accumulation) => slightly looser tolerance vs f32 ref.
    assert jnp.allclose(out, ref, atol=1e-2, rtol=1e-2), "mismatch vs reference"

    print("KERNEL_OK")
</pallas_src>

<mosaic_0001>
module attributes {stable_mosaic.version = 11 : i64} {
  func.func @kernel(%arg0: i32, %arg1: memref<2x4x256xf32, #tpu.memory_space<vmem>>, %arg2: memref<8x20xbf16, #tpu.memory_space<vmem>>, %arg3: memref<2x8x256xf32, #tpu.memory_space<vmem>>) attributes {dimension_semantics = [#tpu.dimension_semantics<parallel>], iteration_bounds = array<i64: 1>, scalar_prefetch = 0 : i64, scratch_operands = 0 : i64, tpu.core_type = #tpu.core_type<tc>, window_params = [{transform_indices = @transform_0, window_bounds = array<i64: 2, 4, 256>}, {pipeline_mode = #tpu.pipeline_mode<synchronous>, transform_indices = @transform_1, window_bounds = array<i64: 8, 20>}, {transform_indices = @transform_2, window_bounds = array<i64: 2, 8, 256>}]} {
    %c0 = arith.constant 0 : index
    %c0_0 = arith.constant 0 : index
    %0 = vector.load %arg2[%c0, %c0_0] : memref<8x20xbf16, #tpu.memory_space<vmem>>, vector<8x20xbf16>
    %c0_1 = arith.constant 0 : index
    %c0_2 = arith.constant 0 : index
    %c0_3 = arith.constant 0 : index
    %1 = vector.load %arg1[%c0_1, %c0_2, %c0_3] : memref<2x4x256xf32, #tpu.memory_space<vmem>>, vector<1x4x256xf32>
    %2 = vector.shape_cast %1 : vector<1x4x256xf32> to vector<4x256xf32>
    %3 = vector.extract_strided_slice %2 {offsets = [0, 1], sizes = [4, 255], strides = [1, 1]} : vector<4x256xf32> to vector<4x255xf32>
    %4 = vector.extract_strided_slice %2 {offsets = [0, 0], sizes = [4, 1], strides = [1, 1]} : vector<4x256xf32> to vector<4x1xf32>
    %5 = tpu.concatenate %3, %4 in 1 : vector<4x255xf32>, vector<4x1xf32> -> vector<4x256xf32>
    %6 = vector.extract_strided_slice %2 {offsets = [0, 2], sizes = [4, 254], strides = [1, 1]} : vector<4x256xf32> to vector<4x254xf32>
    %7 = vector.extract_strided_slice %2 {offsets = [0, 0], sizes = [4, 2], strides = [1, 1]} : vector<4x256xf32> to vector<4x2xf32>
    %8 = tpu.concatenate %6, %7 in 1 : vector<4x254xf32>, vector<4x2xf32> -> vector<4x256xf32>
    %9 = vector.extract_strided_slice %2 {offsets = [0, 3], sizes = [4, 253], strides = [1, 1]} : vector<4x256xf32> to vector<4x253xf32>
    %10 = vector.extract_strided_slice %2 {offsets = [0, 0], sizes = [4, 3], strides = [1, 1]} : vector<4x256xf32> to vector<4x3xf32>
    %11 = tpu.concatenate %9, %10 in 1 : vector<4x253xf32>, vector<4x3xf32> -> vector<4x256xf32>
    %12 = vector.extract_strided_slice %2 {offsets = [0, 4], sizes = [4, 252], strides = [1, 1]} : vector<4x256xf32> to vector<4x252xf32>
    %13 = vector.extract_strided_slice %2 {offsets = [0, 0], sizes = [4, 4], strides = [1, 1]} : vector<4x256xf32> to vector<4x4xf32>
    %14 = tpu.concatenate %12, %13 in 1 : vector<4x252xf32>, vector<4x4xf32> -> vector<4x256xf32>
    %15 = tpu.concatenate %2, %5, %8, %11, %14 in 0 : vector<4x256xf32>, vector<4x256xf32>, vector<4x256xf32>, vector<4x256xf32>, vector<4x256xf32> -> vector<20x256xf32>
    %16 = arith.truncf %15 : vector<20x256xf32> to vector<20x256xbf16>
    %cst = arith.constant dense<0.000000e+00> : vector<8x256xf32>
    %17 = tpu.matmul %0, %16, %cst {dimension_numbers = #tpu.dot_dimension_numbers<[1], [0], [0], [1], [0, 0, 1, 1], [], []>} : vector<8x20xbf16>, vector<20x256xbf16>, vector<8x256xf32> -> vector<8x256xf32>
    %c0_4 = arith.constant 0 : index
    %c0_5 = arith.constant 0 : index
    %c0_6 = arith.constant 0 : index
    %18 = vector.load %arg3[%c0_4, %c0_5, %c0_6] : memref<2x8x256xf32, #tpu.memory_space<vmem>>, vector<1x8x256xf32>
    %19 = vector.shape_cast %18 : vector<1x8x256xf32> to vector<8x256xf32>
    %20 = vector.shape_cast %17 : vector<8x256xf32> to vector<1x8x256xf32>
    tpu.vector_store %arg3[%c0_4, %c0_5, %c0_6], %20 {strides = array<i32>} : memref<2x8x256xf32, #tpu.memory_space<vmem>>, vector<1x8x256xf32>,
    %c1 = arith.constant 1 : index
    %c0_7 = arith.constant 0 : index
    %c0_8 = arith.constant 0 : index
    %21 = vector.load %arg1[%c1, %c0_7, %c0_8] : memref<2x4x256xf32, #tpu.memory_space<vmem>>, vector<1x4x256xf32>
    %22 = vector.shape_cast %21 : vector<1x4x256xf32> to vector<4x256xf32>
    %23 = vector.extract_strided_slice %22 {offsets = [0, 1], sizes = [4, 255], strides = [1, 1]} : vector<4x256xf32> to vector<4x255xf32>
    %24 = vector.extract_strided_slice %22 {offsets = [0, 0], sizes = [4, 1], strides = [1, 1]} : vector<4x256xf32> to vector<4x1xf32>
    %25 = tpu.concatenate %23, %24 in 1 : vector<4x255xf32>, vector<4x1xf32> -> vector<4x256xf32>
    %26 = vector.extract_strided_slice %22 {offsets = [0, 2], sizes = [4, 254], strides = [1, 1]} : vector<4x256xf32> to vector<4x254xf32>
    %27 = vector.extract_strided_slice %22 {offsets = [0, 0], sizes = [4, 2], strides = [1, 1]} : vector<4x256xf32> to vector<4x2xf32>
    %28 = tpu.concatenate %26, %27 in 1 : vector<4x254xf32>, vector<4x2xf32> -> vector<4x256xf32>
    %29 = vector.extract_strided_slice %22 {offsets = [0, 3], sizes = [4, 253], strides = [1, 1]} : vector<4x256xf32> to vector<4x253xf32>
    %30 = vector.extract_strided_slice %22 {offsets = [0, 0], sizes = [4, 3], strides = [1, 1]} : vector<4x256xf32> to vector<4x3xf32>
    %31 = tpu.concatenate %29, %30 in 1 : vector<4x253xf32>, vector<4x3xf32> -> vector<4x256xf32>
    %32 = vector.extract_strided_slice %22 {offsets = [0, 4], sizes = [4, 252], strides = [1, 1]} : vector<4x256xf32> to vector<4x252xf32>
    %33 = vector.extract_strided_slice %22 {offsets = [0, 0], sizes = [4, 4], strides = [1, 1]} : vector<4x256xf32> to vector<4x4xf32>
    %34 = tpu.concatenate %32, %33 in 1 : vector<4x252xf32>, vector<4x4xf32> -> vector<4x256xf32>
    %35 = tpu.concatenate %22, %25, %28, %31, %34 in 0 : vector<4x256xf32>, vector<4x256xf32>, vector<4x256xf32>, vector<4x256xf32>, vector<4x256xf32> -> vector<20x256xf32>
    %36 = arith.truncf %35 : vector<20x256xf32> to vector<20x256xbf16>
    %cst_9 = arith.constant dense<0.000000e+00> : vector<8x256xf32>
    %37 = tpu.matmul %0, %36, %cst_9 {dimension_numbers = #tpu.dot_dimension_numbers<[1], [0], [0], [1], [0, 0, 1, 1], [], []>} : vector<8x20xbf16>, vector<20x256xbf16>, vector<8x256xf32> -> vector<8x256xf32>
    %c1_10 = arith.constant 1 : index
    %c0_11 = arith.constant 0 : index
    %c0_12 = arith.constant 0 : index
    %38 = vector.load %arg3[%c1_10, %c0_11, %c0_12] : memref<2x8x256xf32, #tpu.memory_space<vmem>>, vector<1x8x256xf32>
    %39 = vector.shape_cast %38 : vector<1x8x256xf32> to vector<8x256xf32>
    %40 = vector.shape_cast %37 : vector<8x256xf32> to vector<1x8x256xf32>
    tpu.vector_store %arg3[%c1_10, %c0_11, %c0_12], %40 {strides = array<i32>} : memref<2x8x256xf32, #tpu.memory_space<vmem>>, vector<1x8x256xf32>,
    return
  }
  func.func @transform_0(%arg0: i32) -> (i32, i32, i32) {
    %c0_i32 = arith.constant 0 : i32
    %c0_i32_0 = arith.constant 0 : i32
    %c0_i32_1 = arith.constant 0 : i32
    return %arg0, %c0_i32, %c0_i32_0 : i32, i32, i32
  }
  func.func @transform_1(%arg0: i32) -> (i32, i32) {
    %c0_i32 = arith.constant 0 : i32
    %c0_i32_0 = arith.constant 0 : i32
    %c0_i32_1 = arith.constant 0 : i32
    return %c0_i32, %c0_i32_0 : i32, i32
  }
  func.func @transform_2(%arg0: i32) -> (i32, i32, i32) {
    %c0_i32 = arith.constant 0 : i32
    %c0_i32_0 = arith.constant 0 : i32
    %c0_i32_1 = arith.constant 0 : i32
    return %arg0, %c0_i32, %c0_i32_0 : i32, i32, i32
  }
}

</mosaic_0001>

<llo_original>
// kernel: tpu_custom_call.1
$region0: #{tpu_custom_call.1}
  #allocation0 [shape = 'u32[]', space=smem, size = 0x4, offset = 0x4, fixed_abs, tag = 'smem constant byte address 0x4 - core index']
  #allocation1 [shape = 'u32[144,128]{1,0:T(1,128)}', space=vmem, size = 0x12000, scoped, tag = 'internal scratch']
  %s0 = inlined_call_operand.hbm [shape: f32[2,4,256], index: 0, kind: input, shape index: {}]
  %s1 = inlined_call_operand.hbm [shape: bf16[8,20], index: 1, kind: input, shape index: {}]
  %s2 = inlined_call_operand.hbm [shape: f32[2,8,256], index: 2, kind: output, shape index: {}]
  %s3 = sld [smem:[#allocation0]]
  $region26: #{tpu_custom_call.1} parent=0
    _
  %s5 = ssub.s32 1, %s3
  %s6 = scalar_select 0, %s5, %s3
  $region1: #{tpu_custom_call.1} parent=0
    #allocation2 [shape = 'u8[8192]{0}', space=vmem, size = 0x2000, scoped, tag = 'input window, operand 0, single buffered']
    #allocation3 [shape = 's32[1]{0}', space=sflag, size = 0x4, scoped, tag = 'scoped memory for tpu_custom_call.1']
    #allocation4 [shape = 's32[1]{0}', space=sflag, size = 0x4, scoped, tag = 'scoped memory for tpu_custom_call.1']
    #allocation5 [shape = 'u8[2048]{0}', space=vmem, size = 0x800, scoped, tag = 'input window, operand 1, single buffered']
    #allocation6 [shape = 's32[1]{0}', space=sflag, size = 0x4, scoped, tag = 'scoped memory for tpu_custom_call.1']
    #allocation7 [shape = 'u8[16384]{0}', space=vmem, size = 0x4000, scoped, tag = 'output window, operand 0, single buffered']
    %7 = vsyncpa [#allocation3], 0
    %8 = vsyncpa [#allocation6], 0
    %9 = vsyncpa [#allocation4], 0
    // Predicated region
    $region2: #{tpu_custom_call.1} parent=1 // pred_check
      _
    $region3: #{tpu_custom_call.1} parent=1 // pred_check_branch
      %11 = sbr.rel (0) target = $region5
    $region4: #{tpu_custom_call.1} parent=1 // pred_region
      %s13 = ssub.s32 256, 256
      %14 = vsyncadd [#allocation3], %s13
      %s15 = sshll.u32 [#allocation2], 4
      %s16 = int_to_ptr.vmem [resolvable:$true] %s15
      %21 = dma.hbm_to_vmem [thread:$0]  %s0, 256, %s16, [#allocation3], 128, 128, 8
    $region5: #{tpu_custom_call.1} parent=1 // pred_fallthru
      _
    // Predicated region
    $region6: #{tpu_custom_call.1} parent=1 // pred_check
      _
    $region7: #{tpu_custom_call.1} parent=1 // pred_check_branch
      %23 = sbr.rel (0) target = $region9
    $region8: #{tpu_custom_call.1} parent=1 // pred_region
      %s25 = ssub.s32 64, 64
      %26 = vsyncadd [#allocation6], %s25
      %s28 = sshll.u32 [#allocation5], 4
      %s29 = int_to_ptr.vmem [resolvable:$true] %s28
      %31 = dma.hbm_to_vmem [thread:$0]  %s1, 64, %s29, [#allocation6]
    $region9: #{tpu_custom_call.1} parent=1 // pred_fallthru
      _
    // Predicated region
    $region10: #{tpu_custom_call.1} parent=1 // pred_check
      _
    $region11: #{tpu_custom_call.1} parent=1 // pred_check_branch
      %33 = sbr.rel (0) target = $region13
    $region12: #{tpu_custom_call.1} parent=1 // pred_region
      %34 = dma.done [#allocation3], 256
    $region13: #{tpu_custom_call.1} parent=1 // pred_fallthru
      _
    // Predicated region
    $region14: #{tpu_custom_call.1} parent=1 // pred_check
      _
    $region15: #{tpu_custom_call.1} parent=1 // pred_check_branch
      %36 = sbr.rel (0) target = $region17
    $region16: #{tpu_custom_call.1} parent=1 // pred_region
      %37 = dma.done [#allocation6], 64
    $region17: #{tpu_custom_call.1} parent=1 // pred_fallthru
      _
    %v39 = vld [vmem:[#allocation5] sm:$0xf]
    %v40 = vld [vmem:[#allocation2] sm:$0xff]
    %v42 = vcombine.high %v40, %v40
    %43 = vrot.lane.b32.xlu0 %v40, 127
    %v44 = vpop.permute.xlu0 %43
    %45 = vrot.lane.b32.xlu0 %v42, 127
    %v46 = vpop.permute.xlu0 %45
    %vm47 = vcmask 1039360
    %v48 = vsel %vm47, %v44, %v46
    %v51 = vsel %vm47, %v46, %v44
    %52 = vrot.lane.b32.xlu0 %v40, 126
    %v53 = vpop.permute.xlu0 %52
    %54 = vrot.lane.b32.xlu0 %v42, 126
    %v55 = vpop.permute.xlu0 %54
    %vm56 = vcmask 1031168
    %v57 = vsel %vm56, %v53, %v55
    %v61 = vsel %vm56, %v55, %v53
    %62 = vrot.lane.b32.xlu0 %v40, 125
    %v63 = vpop.permute.xlu0 %62
    %64 = vrot.lane.b32.xlu0 %v42, 125
    %v65 = vpop.permute.xlu0 %64
    %vm66 = vcmask 1022976
    %v67 = vsel %vm66, %v63, %v65
    %v70 = vsel %vm66, %v65, %v63
    %71 = vrot.lane.b32.xlu0 %v40, 124
    %v72 = vpop.permute.xlu0 %71
    %73 = vrot.lane.b32.xlu0 %v42, 124
    %v74 = vpop.permute.xlu0 %73
    %vm75 = vcmask 1014784
    %v76 = vsel %vm75, %v72, %v74
    %v80 = vsel %vm75, %v74, %v72
    %v83 = vrot.slane %v48, 4
    %v84 = vrot.slane %v51, 4
    %v88 = vrot.slane %v67, 4
    %v89 = vrot.slane %v70, 4
    %vm92 = vcmask 1043456
    %v93 = vsel %vm92, %v40, %v83
    %v94 = vsel %vm92, %v42, %v84
    %v95 = vsel %vm92, %v57, %v88
    %v96 = vsel %vm92, %v61, %v89
    %v97 = vpack.c.bf16 %v95, %v93
    %v98 = vpack.c.bf16 %v96, %v94
    %v99 = vpack.c.bf16 %v76, %v76
    %v100 = vpack.c.bf16 %v80, %v80
    %vm101 = vcmask 162816
    %v103 = vsel %vm101, %v39, 0
    %vm105 = vcmask 1041408
    %v107 = vsel %vm105, %v99, 0
    %v110 = vsel %vm105, %v100, 0
    %112 = vmatprep.subr.bf16.mxu0 0
    %113 = vmatpush1.bf16.msra.mxu0 0
    %114 = vmatprep.subr.bf16.mxu0 0
    %115 = vmatpush1.bf16.msra.mxu0 0
    %116 = vmatprep.subr.bf16.mxu0 0
    %117 = vmatpush1.bf16.msra.mxu0 0
    %118 = vmatprep.subr.bf16.mxu0 0
    %119 = vmatpush1.bf16.msra.mxu0 0
    %120 = vmatprep.subr.bf16.mxu0 0
    %121 = vmatpush1.bf16.msra.mxu0 0
    %122 = vmatprep.subr.bf16.mxu0 0
    %123 = vmatpush1.bf16.msra.mxu0 0
    %124 = vmatprep.subr.bf16.mxu0 %v110
    %125 = vmatpush1.bf16.msra.mxu0 %v107
    %126 = vmatprep.subr.bf16.mxu0 %v98
    %127 = vmatpush1.bf16.msra.mxu0 %v97
    %128 = vmatprep.subr.bf16.mxu0 0
    %129 = vmatpush2.bf16.msra.mxu0 0
    %130 = vmatprep.subr.bf16.mxu0 0
    %131 = vmatpush2.bf16.msra.mxu0 0
    %132 = vmatprep.subr.bf16.mxu0 0
    %133 = vmatpush2.bf16.msra.mxu0 0
    %134 = vmatprep.subr.bf16.mxu0 0
    %135 = vmatpush2.bf16.msra.mxu0 0
    %136 = vmatprep.subr.bf16.mxu0 0
    %137 = vmatpush2.bf16.msra.mxu0 0
    %138 = vmatprep.subr.bf16.mxu0 0
    %139 = vmatpush2.bf16.msra.mxu0 0
    %140 = vmatprep.subr.bf16.mxu0 0
    %141 = vmatpush2.bf16.msra.mxu0 0
    %142 = vmatprep.subr.bf16.mxu0 0
    %143 = vmatpush2.bf16.msra.mxu0 0
    %144 = vmatprep.mubr.bf16.mxu0 0
    %145 = vmatmul.mubr.bf16.gmra.mxu0 %v103
    %v146 = vpop.f32.mrf.mxu0
    %v147 = vadd.f32 0.0, %v146
    %v148 = vpop.f32.mrf.mxu0
    %v149 = vadd.f32 0.0, %v148
    %v150 = vpop.f32.mrf.mxu0
    %v151 = vpop.f32.mrf.mxu0
    %152 = vdwg.mxu0
    %153 = vst [vmem:[#allocation7] sm:$0xff] %v147
    %154 = vst [vmem:[#allocation7 + $0x8] sm:$0xff] %v149
    %s155 = scalar_lea.vmem [#allocation2], 8
    %v156 = vld [vmem:[%s155] sm:$0xff]
    %v158 = vcombine.high %v156, %v156
    %159 = vrot.lane.b32.xlu0 %v156, 127
    %v160 = vpop.permute.xlu0 %159
    %161 = vrot.lane.b32.xlu0 %v158, 127
    %v162 = vpop.permute.xlu0 %161
    %v163 = vsel %vm47, %v160, %v162
    %v166 = vsel %vm47, %v162, %v160
    %167 = vrot.lane.b32.xlu0 %v156, 126
    %v168 = vpop.permute.xlu0 %167
    %169 = vrot.lane.b32.xlu0 %v158, 126
    %v170 = vpop.permute.xlu0 %169
    %v171 = vsel %vm56, %v168, %v170
    %v175 = vsel %vm56, %v170, %v168
    %176 = vrot.lane.b32.xlu0 %v156, 125
    %v177 = vpop.permute.xlu0 %176
    %178 = vrot.lane.b32.xlu0 %v158, 125
    %v179 = vpop.permute.xlu0 %178
    %v180 = vsel %vm66, %v177, %v179
    %v183 = vsel %vm66, %v179, %v177
    %184 = vrot.lane.b32.xlu0 %v156, 124
    %v185 = vpop.permute.xlu0 %184
    %186 = vrot.lane.b32.xlu0 %v158, 124
    %v187 = vpop.permute.xlu0 %186
    %v188 = vsel %vm75, %v185, %v187
    %v192 = vsel %vm75, %v187, %v185
    %v195 = vrot.slane %v163, 4
    %v196 = vrot.slane %v166, 4
    %v200 = vrot.slane %v180, 4
    %v201 = vrot.slane %v183, 4
    %v204 = vsel %vm92, %v156, %v195
    %v205 = vsel %vm92, %v158, %v196
    %v206 = vsel %vm92, %v171, %v200
    %v207 = vsel %vm92, %v175, %v201
    %v208 = vpack.c.bf16 %v206, %v204
    %v209 = vpack.c.bf16 %v207, %v205
    %v210 = vpack.c.bf16 %v188, %v188
    %v211 = vpack.c.bf16 %v192, %v192
    %v213 = vsel %vm105, %v210, 0
    %v216 = vsel %vm105, %v211, 0
    %218 = vmatprep.subr.bf16.mxu0 0
    %219 = vmatpush1.bf16.msra.mxu0 0
    %220 = vmatprep.subr.bf16.mxu0 0
    %221 = vmatpush1.bf16.msra.mxu0 0
    %222 = vmatprep.subr.bf16.mxu0 0
    %223 = vmatpush1.bf16.msra.mxu0 0
    %224 = vmatprep.subr.bf16.mxu0 0
    %225 = vmatpush1.bf16.msra.mxu0 0
    %226 = vmatprep.subr.bf16.mxu0 0
    %227 = vmatpush1.bf16.msra.mxu0 0
    %228 = vmatprep.subr.bf16.mxu0 0
    %229 = vmatpush1.bf16.msra.mxu0 0
    %230 = vmatprep.subr.bf16.mxu0 %v216
    %231 = vmatpush1.bf16.msra.mxu0 %v213
    %232 = vmatprep.subr.bf16.mxu0 %v209
    %233 = vmatpush1.bf16.msra.mxu0 %v208
    %234 = vmatprep.subr.bf16.mxu0 0
    %235 = vmatpush2.bf16.msra.mxu0 0
    %236 = vmatprep.subr.bf16.mxu0 0
    %237 = vmatpush2.bf16.msra.mxu0 0
    %238 = vmatprep.subr.bf16.mxu0 0
    %239 = vmatpush2.bf16.msra.mxu0 0
    %240 = vmatprep.subr.bf16.mxu0 0
    %241 = vmatpush2.bf16.msra.mxu0 0
    %242 = vmatprep.subr.bf16.mxu0 0
    %243 = vmatpush2.bf16.msra.mxu0 0
    %244 = vmatprep.subr.bf16.mxu0 0
    %245 = vmatpush2.bf16.msra.mxu0 0
    %246 = vmatprep.subr.bf16.mxu0 0
    %247 = vmatpush2.bf16.msra.mxu0 0
    %248 = vmatprep.subr.bf16.mxu0 0
    %249 = vmatpush2.bf16.msra.mxu0 0
    %250 = vmatprep.mubr.bf16.mxu0 0
    %251 = vmatmul.mubr.bf16.gmra.mxu0 %v103
    %v252 = vpop.f32.mrf.mxu0
    %v253 = vadd.f32 0.0, %v252
    %v254 = vpop.f32.mrf.mxu0
    %v255 = vadd.f32 0.0, %v254
    %v256 = vpop.f32.mrf.mxu0
    %v257 = vpop.f32.mrf.mxu0
    %258 = vdwg.mxu0
    %s259 = scalar_lea.vmem [#allocation7], 16
    %260 = vst [vmem:[%s259] sm:$0xff] %v253
    %261 = vst [vmem:[%s259 + $0x8] sm:$0xff] %v255
    // Predicated region
    $region18: #{tpu_custom_call.1} parent=1 // pred_check
      _
    $region19: #{tpu_custom_call.1} parent=1 // pred_check_branch
      %263 = sbr.rel (0) target = $region21
    $region20: #{tpu_custom_call.1} parent=1 // pred_region
      %s265 = ssub.s32 512, 512
      %266 = vsyncadd [#allocation4], %s265
      %s267 = sshll.u32 [#allocation7], 4
      %s268 = int_to_ptr.vmem [resolvable:$true] %s267
      %273 = dma.vmem_to_hbm [thread:$0]  %s268, 512, %s2, [#allocation4], 256, 256, 16
    $region21: #{tpu_custom_call.1} parent=1 // pred_fallthru
      _
    // Predicated region
    $region22: #{tpu_custom_call.1} parent=1 // pred_check
      _
    $region23: #{tpu_custom_call.1} parent=1 // pred_check_branch
      %275 = sbr.rel (0) target = $region25
    $region24: #{tpu_custom_call.1} parent=1 // pred_region
      %276 = dma.done [#allocation4], 512
    $region25: #{tpu_custom_call.1} parent=1 // pred_fallthru
      _
    %277 = vsyncpa [#allocation3], 1
    %278 = vsyncpa [#allocation6], 1
    %279 = vsyncpa [#allocation4], 1

</llo_original>
